<compile_context>
chip_gen: v6e
topology: v6e:2x2x1
jax: 0.10.0
libtpu: 0.0.40
codegen_flags: <defaults>
</compile_context>

<pallas_src>
import math

import jax
import jax.numpy as jnp
from jax.experimental import pallas as pl
from jax.experimental.pallas import tpu as pltpu

LANE = 128


# ----------------------------- Pallas kernel ------------------------------- #

def _fused_linear_kernel(buf_ref, x_ref, w_ref, b_ref, o_ref):
    # out = x @ W_eff + b_tiled + buf with K=4 expanded into 4 VPU
    # broadcast-multiply-adds (the MXU would be <4% utilized at K=4).
    x = x_ref[...]                                        # (bm, 4)   f32
    w = w_ref[...]                                        # (4,  bn)  f32
    acc = b_ref[...] + buf_ref[0].astype(jnp.float32)     # (1,  bn)
    for k in range(4):                                    # unrolled at trace time
        acc = acc + x[:, k:k + 1] * w[k:k + 1, :]         # (bm,1)*(1,bn) -> (bm,bn)
    o_ref[...] = acc


# ------------------------------ Wrapper ------------------------------------ #

def fused_forward(x, w_eff, b_tiled, buf, *, block_m=None, block_n=None):
    """x: (N,4) f32, w_eff: (4,HHp) f32, b_tiled: (1,HHp) f32, buf: (1,) i32
    -> (N, HHp) f32, with HHp a multiple of 128 (lane-dense output)."""
    N, K = x.shape
    HHp = w_eff.shape[1]
    assert K == 4 and HHp % LANE == 0

    # Row tiling: fixed-size tiles, ragged tail handled (masked) by Pallas.
    if block_m is None:
        block_m = min(N, 512)
    grid_m = pl.cdiv(N, block_m)

    # Column tiling: multiples of 128, capped at 2048 lanes (bounds VMEM on v7x),
    # and split into >= 2 tiles when possible so both v7x TensorCores get work.
    if block_n is None:
        n_tiles = HHp // LANE
        if n_tiles >= 2:
            block_n = min(((n_tiles + 1) // 2) * LANE, 2048)
        else:
            block_n = HHp
    grid_n = pl.cdiv(HHp, block_n)

    cost = pl.CostEstimate(
        flops=2 * N * K * HHp,
        transcendentals=0,
        bytes_accessed=(N * K + K * HHp + HHp + N * HHp) * 4,
    )

    return pl.pallas_call(
        _fused_linear_kernel,
        out_shape=jax.ShapeDtypeStruct((N, HHp), jnp.float32),
        grid=(grid_m, grid_n),
        in_specs=[
            pl.BlockSpec(memory_space=pltpu.MemorySpace.SMEM),   # buf (live scalar)
            pl.BlockSpec((block_m, K), lambda i, j: (i, 0)),     # x rows
            pl.BlockSpec((K, block_n), lambda i, j: (0, j)),     # W_eff columns
            pl.BlockSpec((1, block_n), lambda i, j: (0, j)),     # bias columns
        ],
        out_specs=pl.BlockSpec((block_m, block_n), lambda i, j: (i, j)),
        compiler_params=pltpu.CompilerParams(
            dimension_semantics=("parallel", "parallel"),
        ),
        cost_estimate=cost,
    )(buf, x, w_eff, b_tiled)


# ------------------------- Parameters / forward ----------------------------- #

def init_params(h, key):
    """Deterministic init mimicking torch.nn.Linear default U(-1/sqrt(fan_in), +)."""
    k1, k2, k3 = jax.random.split(key, 3)
    bound_inner = 1.0 / math.sqrt(4.0)   # Submodule.l: Linear(4, 2h, bias=False)
    w_inner = jax.random.uniform(k1, (2 * h, 4), jnp.float32,
                                 -bound_inner, bound_inner)
    bound_outer = 1.0 / math.sqrt(2.0)   # MyModel.l: Linear(2, h)
    w_outer = jax.random.uniform(k2, (h, 2), jnp.float32,
                                 -bound_outer, bound_outer)
    b_outer = jax.random.uniform(k3, (h,), jnp.float32,
                                 -bound_outer, bound_outer)
    buf = jnp.array(0, jnp.int32)        # register_buffer('buf', torch.tensor(0))
    return dict(w_inner=w_inner, w_outer=w_outer, b_outer=b_outer, buf=buf)


def prepare_fused_params(params):
    """One-time weight folding + zero-pad to a lane-dense (multiple-of-128) slab.
    NOTE: buf is NOT folded here; it is passed live to the kernel via SMEM."""
    w1 = params["w_inner"]                         # (2h, 4)
    w2 = params["w_outer"]                         # (h, 2)
    b = params["b_outer"]                          # (h,)
    h = w2.shape[0]
    hh = h * h
    hh_pad = ((hh + LANE - 1) // LANE) * LANE

    # W_eff[k, j*h + o] = sum_c W1[j*2+c, k] * W2[o, c]   -> (4, h*h)
    w1r = w1.reshape(h, 2, 4)                      # [j, c, k]
    w_eff = jnp.einsum("jck,oc->kjo", w1r, w2).reshape(4, hh)
    b_tiled = jnp.tile(b, (h,)).reshape(1, hh)     # b_tiled[j*h + o] = b[o]

    if hh_pad != hh:                               # zero-pad columns for full-lane vst
        w_eff = jnp.pad(w_eff, ((0, 0), (0, hh_pad - hh)))
        b_tiled = jnp.pad(b_tiled, ((0, 0), (0, hh_pad - hh)))
    return dict(w_eff=w_eff, b_tiled=b_tiled, h=h, hh=hh)


def my_model_forward(fused, params, x):
    h, hh = fused["h"], fused["hh"]
    N = x.shape[0]
    buf = params["buf"].reshape(1).astype(jnp.int32)          # live buffer value
    out_flat = fused_forward(x, fused["w_eff"], fused["b_tiled"], buf)  # (N, hh_pad)
    # Drop lane padding (no-op when hh % 128 == 0), then pure row-major view.
    return out_flat[:, :hh].reshape(N * h, h)


def _reference(params, x):
    """Pure-JAX reference: the original two-matmul formulation."""
    y = x @ params["w_inner"].T                     # (N, 2h)
    y2 = y.reshape(-1, 2)                           # (N*h, 2)
    return y2 @ params["w_outer"].T + params["b_outer"] + params["buf"].astype(jnp.float32)


# --------------------------------- Main ------------------------------------ #

if __name__ == "__main__":
    key = jax.random.PRNGKey(0)
    pkey, xkey, pkey2, xkey2 = jax.random.split(key, 4)

    # Case 1: lane-dense h (h*h multiple of 128).
    h, N = 16, 8
    params = init_params(h, pkey)
    fused = prepare_fused_params(params)
    x = jax.random.normal(xkey, (N, 4), dtype=jnp.float32)
    out = jax.block_until_ready(my_model_forward(fused, params, x))
    ref = _reference(params, x)
    assert out.shape == (N * h, h)
    assert jnp.allclose(out, ref, atol=1e-5, rtol=1e-5), "Pallas result mismatch (h=16)"

    # Case 2: non-multiple-of-128 h*h exercises the zero-padding / slice path,
    # and N not a multiple of 8 exercises the full-array row block.
    h2, N2 = 12, 10
    params2 = init_params(h2, pkey2)
    fused2 = prepare_fused_params(params2)
    x2 = jax.random.normal(xkey2, (N2, 4), dtype=jnp.float32)
    out2 = jax.block_until_ready(my_model_forward(fused2, params2, x2))
    ref2 = _reference(params2, x2)
    assert out2.shape == (N2 * h2, h2)
    assert jnp.allclose(out2, ref2, atol=1e-5, rtol=1e-5), "Pallas result mismatch (h=12)"

    print("KERNEL_OK")
</pallas_src>

<mosaic_0001>
module attributes {stable_mosaic.version = 11 : i64} {
  func.func @_fused_linear_kernel(%arg0: i32, %arg1: i32, %arg2: memref<1xi32, #tpu.memory_space<smem>>, %arg3: memref<8x4xf32, #tpu.memory_space<vmem>>, %arg4: memref<4x128xf32, #tpu.memory_space<vmem>>, %arg5: memref<1x128xf32, #tpu.memory_space<vmem>>, %arg6: memref<8x128xf32, #tpu.memory_space<vmem>>) attributes {dimension_semantics = [#tpu.dimension_semantics<parallel>, #tpu.dimension_semantics<parallel>], iteration_bounds = array<i64: 1, 2>, scalar_prefetch = 0 : i64, scratch_operands = 0 : i64, tpu.core_type = #tpu.core_type<tc>, window_params = [{transform_indices = @transform_0, window_bounds = array<i64: 1>}, {transform_indices = @transform_1, window_bounds = array<i64: 8, 4>}, {transform_indices = @transform_2, window_bounds = array<i64: 4, 128>}, {transform_indices = @transform_3, window_bounds = array<i64: 1, 128>}, {transform_indices = @transform_4, window_bounds = array<i64: 8, 128>}]} {
    %c0 = arith.constant 0 : index
    %c0_0 = arith.constant 0 : index
    %0 = vector.load %arg3[%c0, %c0_0] : memref<8x4xf32, #tpu.memory_space<vmem>>, vector<8x4xf32>
    %c0_1 = arith.constant 0 : index
    %c0_2 = arith.constant 0 : index
    %1 = vector.load %arg4[%c0_1, %c0_2] : memref<4x128xf32, #tpu.memory_space<vmem>>, vector<4x128xf32>
    %c0_3 = arith.constant 0 : index
    %c0_4 = arith.constant 0 : index
    %2 = vector.load %arg5[%c0_3, %c0_4] : memref<1x128xf32, #tpu.memory_space<vmem>>, vector<1x128xf32>
    %c0_5 = arith.constant 0 : index
    %3 = memref.load %arg2[%c0_5] : memref<1xi32, #tpu.memory_space<smem>>
    %4 = arith.sitofp %3 : i32 to f32
    %5 = vector.broadcast %4 : f32 to vector<1x128xf32>
    %6 = arith.addf %2, %5 : vector<1x128xf32>
    %7 = vector.extract_strided_slice %0 {offsets = [0, 0], sizes = [8, 1], strides = [1, 1]} : vector<8x4xf32> to vector<8x1xf32>
    %8 = vector.extract_strided_slice %1 {offsets = [0, 0], sizes = [1, 128], strides = [1, 1]} : vector<4x128xf32> to vector<1x128xf32>
    %9 = vector.broadcast %7 : vector<8x1xf32> to vector<8x128xf32>
    %10 = vector.broadcast %8 : vector<1x128xf32> to vector<8x128xf32>
    %11 = arith.mulf %9, %10 : vector<8x128xf32>
    %12 = vector.broadcast %6 : vector<1x128xf32> to vector<8x128xf32>
    %13 = arith.addf %12, %11 : vector<8x128xf32>
    %14 = vector.extract_strided_slice %0 {offsets = [0, 1], sizes = [8, 1], strides = [1, 1]} : vector<8x4xf32> to vector<8x1xf32>
    %15 = vector.extract_strided_slice %1 {offsets = [1, 0], sizes = [1, 128], strides = [1, 1]} : vector<4x128xf32> to vector<1x128xf32>
    %16 = vector.broadcast %14 : vector<8x1xf32> to vector<8x128xf32>
    %17 = vector.broadcast %15 : vector<1x128xf32> to vector<8x128xf32>
    %18 = arith.mulf %16, %17 : vector<8x128xf32>
    %19 = arith.addf %13, %18 : vector<8x128xf32>
    %20 = vector.extract_strided_slice %0 {offsets = [0, 2], sizes = [8, 1], strides = [1, 1]} : vector<8x4xf32> to vector<8x1xf32>
    %21 = vector.extract_strided_slice %1 {offsets = [2, 0], sizes = [1, 128], strides = [1, 1]} : vector<4x128xf32> to vector<1x128xf32>
    %22 = vector.broadcast %20 : vector<8x1xf32> to vector<8x128xf32>
    %23 = vector.broadcast %21 : vector<1x128xf32> to vector<8x128xf32>
    %24 = arith.mulf %22, %23 : vector<8x128xf32>
    %25 = arith.addf %19, %24 : vector<8x128xf32>
    %26 = vector.extract_strided_slice %0 {offsets = [0, 3], sizes = [8, 1], strides = [1, 1]} : vector<8x4xf32> to vector<8x1xf32>
    %27 = vector.extract_strided_slice %1 {offsets = [3, 0], sizes = [1, 128], strides = [1, 1]} : vector<4x128xf32> to vector<1x128xf32>
    %28 = vector.broadcast %26 : vector<8x1xf32> to vector<8x128xf32>
    %29 = vector.broadcast %27 : vector<1x128xf32> to vector<8x128xf32>
    %30 = arith.mulf %28, %29 : vector<8x128xf32>
    %31 = arith.addf %25, %30 : vector<8x128xf32>
    %c0_6 = arith.constant 0 : index
    %c0_7 = arith.constant 0 : index
    %32 = vector.load %arg6[%c0_6, %c0_7] : memref<8x128xf32, #tpu.memory_space<vmem>>, vector<8x128xf32>
    tpu.vector_store %arg6[%c0_6, %c0_7], %31 {strides = array<i32>} : memref<8x128xf32, #tpu.memory_space<vmem>>, vector<8x128xf32>,
    return
  }
  func.func @transform_0(%arg0: i32, %arg1: i32) -> i32 {
    %c0_i32 = arith.constant 0 : i32
    %c0_i32_0 = arith.constant 0 : i32
    return %c0_i32 : i32
  }
  func.func @transform_1(%arg0: i32, %arg1: i32) -> (i32, i32) {
    %c0_i32 = arith.constant 0 : i32
    %c0_i32_0 = arith.constant 0 : i32
    return %arg0, %c0_i32 : i32, i32
  }
  func.func @transform_2(%arg0: i32, %arg1: i32) -> (i32, i32) {
    %c0_i32 = arith.constant 0 : i32
    %c0_i32_0 = arith.constant 0 : i32
    return %c0_i32, %arg1 : i32, i32
  }
  func.func @transform_3(%arg0: i32, %arg1: i32) -> (i32, i32) {
    %c0_i32 = arith.constant 0 : i32
    %c0_i32_0 = arith.constant 0 : i32
    return %c0_i32, %arg1 : i32, i32
  }
  func.func @transform_4(%arg0: i32, %arg1: i32) -> (i32, i32) {
    %c0_i32 = arith.constant 0 : i32
    return %arg0, %arg1 : i32, i32
  }
}

</mosaic_0001>

<llo_original>
// kernel: tpu_custom_call.1
$region0: #{tpu_custom_call.1}
  #allocation0 [shape = 'u32[]', space=smem, size = 0x4, offset = 0x4, fixed_abs, tag = 'smem constant byte address 0x4 - core index']
  #allocation1 [shape = 'u32[144,128]{1,0:T(1,128)}', space=vmem, size = 0x12000, scoped, tag = 'internal scratch']
  #allocation2 [shape = 's32[1]{0:T(128)S(6)}', space=smem, size = 0x200, scoped, tag = 'scoped memory for tpu_custom_call.1']
  %s0 = inlined_call_operand.<no memory space> [shape: s32[1], index: 0, kind: input, shape index: {}]
  %s1 = inlined_call_operand.vmem [shape: f32[8,4], index: 1, kind: input, shape index: {}]
  %s2 = inlined_call_operand.vmem [shape: f32[4,256], index: 2, kind: input, shape index: {}]
  %s3 = inlined_call_operand.vmem [shape: f32[1,256], index: 3, kind: input, shape index: {}]
  %s4 = inlined_call_operand.hbm [shape: f32[8,256], index: 4, kind: output, shape index: {}]
  %s5 = sld [smem:[#allocation0]]
  $region49: #{tpu_custom_call.1} parent=0
    _
  %s7 = ssub.s32 1, %s5
  %s8 = scalar_select 0, %s7, %s5
  %9 = sst [smem:[#allocation2]] %s0
  $region1: #{tpu_custom_call.1} parent=0
    #allocation3 [shape = 'u8[8192]{0}', space=vmem, size = 0x2000, scoped, tag = 'output window, operand 0']
    #allocation4 [shape = 's32[2]{0}', space=sflag, size = 0x8, scoped, tag = 'scoped memory for tpu_custom_call.1']
    %10 = vsyncpa [#allocation4], 0
    %s11 = scalar_lea.sflag [#allocation4], 1
    %12 = vsyncpa %s11, 0
    loop: start=0, step=1, limit=4
    $region2: #{tpu_custom_call.1} parent=1 // loop_pre_header
      _
    $region3: #{tpu_custom_call.1} parent=1 // loop_header
      %s14 = sphi 0, %s18
      %p15 = scmp.ge.s32.totalorder %s14, 4
      %s21 = sphi 0, %s33
      %s22 = sphi 0, %s29
      %s23 = sphi 0, %s21
      %s24 = sphi 0, %s22
      %s25 = sphi 0, %s23
      %s26 = sphi 0, %s24
      %s34 = sphi 0, %s34
      %s36 = sphi 0, %s34
      %s37 = sphi 0, %s36
      %s51 = sphi 0, %s37
      %s57 = sphi 0, %s59
      %s60 = sphi 0, %s57
      %s61 = sphi 0, %s60
      %s77 = sphi 0, %s61
      %s83 = sphi 0, %s85
      %s86 = sphi 0, %s83
      %s87 = sphi 0, %s86
      %s103 = sphi 0, %s87
      %s109 = sphi 0, %s111
      %s112 = sphi 0, %s109
      %s113 = sphi 0, %s112
      %s129 = sphi 0, %s113
      %s137 = sphi 0, %s139
      %s140 = sphi 0, %s137
      %s141 = sphi 0, %s140
      %s157 = sphi 0, %s141
    $region4: #{tpu_custom_call.1} parent=1 // loop_header_branch
      %17 = sbr.rel (%p15) target = $region8
    $region5: #{tpu_custom_call.1} parent=1 // loop_body
      %s19 = ssub.s32 %s14, 1
      %s20 = ssub.s32 %s14, 2
      %s27 = sadd.s32 1, %s22
      %p28 = scmp.ge.s32.totalorder %s27, 2
      %s29 = scalar_select %p28, 0, %s27
      %s30 = sadd.s32 1, %s21
      %s31 = scalar_select %p28, %s30, %s21
      %p32 = scmp.ge.s32.totalorder %s31, 1
      %s33 = scalar_select %p32, 0, %s31
      %s35 = sadd.s32 %s34, 1
      %p38 = scmp.eq.s32.totalorder %s14, 1
      %p39 = scmp.ne.s32.totalorder %s34, %s36
      %p40 = scmp.eq.s32.totalorder %s14, 0
      %p41 = por %p39, %p40
      %p42 = scmp.ne.s32.totalorder %s34, %s36
      %p43 = scmp.eq.s32.totalorder %s19, 1
      %p44 = por %p42, %p43
      %p45 = scmp.ne.s32.totalorder %s36, %s37
      %p46 = scmp.eq.s32.totalorder %s19, 0
      %p47 = por %p45, %p46
      %p48 = scmp.ne.s32.totalorder %s36, %s37
      %p49 = scmp.eq.s32.totalorder %s20, 1
      %p50 = por %p48, %p49
      %p52 = scmp.ne.s32.totalorder %s37, %s51
      %p53 = scmp.eq.s32.totalorder %s20, 0
      %p54 = por %p52, %p53
      %s55 = ssub.s32 %s21, %s33
      %p56 = scmp.eq.s32.totalorder %s55, 0
      %s58 = sadd.s32 %s57, 1
      %s59 = scalar_select %p56, %s57, %s58
      %p62 = pneg %p56
      %p63 = scmp.eq.s32.totalorder %s14, 1
      %p64 = por %p62, %p63
      %p65 = scmp.ne.s32.totalorder %s57, %s60
      %p66 = scmp.eq.s32.totalorder %s14, 0
      %p67 = por %p65, %p66
      %p68 = scmp.ne.s32.totalorder %s57, %s60
      %p69 = scmp.eq.s32.totalorder %s19, 1
      %p70 = por %p68, %p69
      %p71 = scmp.ne.s32.totalorder %s60, %s61
      %p72 = scmp.eq.s32.totalorder %s19, 0
      %p73 = por %p71, %p72
      %p74 = scmp.ne.s32.totalorder %s60, %s61
      %p75 = scmp.eq.s32.totalorder %s20, 1
      %p76 = por %p74, %p75
      %p78 = scmp.ne.s32.totalorder %s61, %s77
      %p79 = scmp.eq.s32.totalorder %s20, 0
      %p80 = por %p78, %p79
      %s81 = ssub.s32 %s22, %s29
      %p82 = scmp.eq.s32.totalorder %s81, 0
      %s84 = sadd.s32 %s83, 1
      %s85 = scalar_select %p82, %s83, %s84
      %p88 = pneg %p82
      %p89 = scmp.eq.s32.totalorder %s14, 1
      %p90 = por %p88, %p89
      %p91 = scmp.ne.s32.totalorder %s83, %s86
      %p92 = scmp.eq.s32.totalorder %s14, 0
      %p93 = por %p91, %p92
      %p94 = scmp.ne.s32.totalorder %s83, %s86
      %p95 = scmp.eq.s32.totalorder %s19, 1
      %p96 = por %p94, %p95
      %p97 = scmp.ne.s32.totalorder %s86, %s87
      %p98 = scmp.eq.s32.totalorder %s19, 0
      %p99 = por %p97, %p98
      %p100 = scmp.ne.s32.totalorder %s86, %s87
      %p101 = scmp.eq.s32.totalorder %s20, 1
      %p102 = por %p100, %p101
      %p104 = scmp.ne.s32.totalorder %s87, %s103
      %p105 = scmp.eq.s32.totalorder %s20, 0
      %p106 = por %p104, %p105
      %s107 = ssub.s32 %s22, %s29
      %p108 = scmp.eq.s32.totalorder %s107, 0
      %s110 = sadd.s32 %s109, 1
      %s111 = scalar_select %p108, %s109, %s110
      %p114 = pneg %p108
      %p115 = scmp.eq.s32.totalorder %s14, 1
      %p116 = por %p114, %p115
      %p117 = scmp.ne.s32.totalorder %s109, %s112
      %p118 = scmp.eq.s32.totalorder %s14, 0
      %p119 = por %p117, %p118
      %p120 = scmp.ne.s32.totalorder %s109, %s112
      %p121 = scmp.eq.s32.totalorder %s19, 1
      %p122 = por %p120, %p121
      %p123 = scmp.ne.s32.totalorder %s112, %s113
      %p124 = scmp.eq.s32.totalorder %s19, 0
      %p125 = por %p123, %p124
      %p126 = scmp.ne.s32.totalorder %s112, %s113
      %p127 = scmp.eq.s32.totalorder %s20, 1
      %p128 = por %p126, %p127
      %p130 = scmp.ne.s32.totalorder %s113, %s129
      %p131 = scmp.eq.s32.totalorder %s20, 0
      %p132 = por %p130, %p131
      %s133 = ssub.s32 %s21, %s33
      %s134 = ssub.s32 %s22, %s29
      %s135 = sor.u32 %s133, %s134
      %p136 = scmp.eq.s32.totalorder %s135, 0
      %s138 = sadd.s32 %s137, 1
      %s139 = scalar_select %p136, %s137, %s138
      %p142 = pneg %p136
      %p143 = scmp.eq.s32.totalorder %s14, 1
      %p144 = por %p142, %p143
      %p145 = scmp.ne.s32.totalorder %s137, %s140
      %p146 = scmp.eq.s32.totalorder %s14, 0
      %p147 = por %p145, %p146
      %p148 = scmp.ne.s32.totalorder %s137, %s140
      %p149 = scmp.eq.s32.totalorder %s19, 1
      %p150 = por %p148, %p149
      %p151 = scmp.ne.s32.totalorder %s140, %s141
      %p152 = scmp.eq.s32.totalorder %s19, 0
      %p153 = por %p151, %p152
      %p154 = scmp.ne.s32.totalorder %s140, %s141
      %p155 = scmp.eq.s32.totalorder %s20, 1
      %p156 = por %p154, %p155
      %p158 = scmp.ne.s32.totalorder %s141, %s157
      %p159 = scmp.eq.s32.totalorder %s20, 0
      %p160 = por %p158, %p159
      %p161 = scmp.le.s32.totalorder 1, %s14
      %p162 = scmp.lt.s32.totalorder %s14, 3
      %p163 = pnand %p161, %p162
      %p164 = pneg %p163
      // Predicated region
      $region9: #{tpu_custom_call.1} parent=5 // pred_check
        _
      $region10: #{tpu_custom_call.1} parent=5 // pred_check_branch
        %166 = sbr.rel (%p163) target = $region12
      $region11: #{tpu_custom_call.1} parent=5 // pred_region
        %s167 = ssub.s32 %s14, 1
        // Predicated region
        $region13: #{tpu_custom_call.1} parent=11 // pred_check
          %p168 = pneg %p47
        $region14: #{tpu_custom_call.1} parent=11 // pred_check_branch
          %170 = sbr.rel (%p168) target = $region16
        $region15: #{tpu_custom_call.1} parent=11 // pred_region
          _
        $region16: #{tpu_custom_call.1} parent=11 // pred_fallthru
          _
        // Predicated region
        $region17: #{tpu_custom_call.1} parent=11 // pred_check
          %p171 = pneg %p73
        $region18: #{tpu_custom_call.1} parent=11 // pred_check_branch
          %173 = sbr.rel (%p171) target = $region20
        $region19: #{tpu_custom_call.1} parent=11 // pred_region
          %p174 = scmp.lt.s32.totalorder %s23, 0
          %s175 = scalar_select %p174, %s23, 0
          %s176 = smul.addr %s175, 8
          %s177 = scalar_lea.vmem %s1, %s176
        $region20: #{tpu_custom_call.1} parent=11 // pred_fallthru
          _
      $region12: #{tpu_custom_call.1} parent=5 // pred_fallthru
        _
      %p178 = scmp.lt.s32.totalorder %s14, 2
      // Predicated region
      $region21: #{tpu_custom_call.1} parent=5 // pred_check
        %p179 = pneg %p178
      $region22: #{tpu_custom_call.1} parent=5 // pred_check_branch
        %181 = sbr.rel (%p179) target = $region24
      $region23: #{tpu_custom_call.1} parent=5 // pred_region
        // Predicated region
        $region25: #{tpu_custom_call.1} parent=23 // pred_check
          %p182 = pneg %p93
        $region26: #{tpu_custom_call.1} parent=23 // pred_check_branch
          %184 = sbr.rel (%p182) target = $region28
        $region27: #{tpu_custom_call.1} parent=23 // pred_region
          %p185 = scmp.lt.s32.totalorder %s22, 1
          %s186 = scalar_select %p185, %s22, 1
          %s187 = smul.addr %s186, 4
          %s188 = scalar_lea.vmem %s2, %s187
        $region28: #{tpu_custom_call.1} parent=23 // pred_fallthru
          _
        // Predicated region
        $region29: #{tpu_custom_call.1} parent=23 // pred_check
          %p189 = pneg %p119
        $region30: #{tpu_custom_call.1} parent=23 // pred_check_branch
          %191 = sbr.rel (%p189) target = $region32
        $region31: #{tpu_custom_call.1} parent=23 // pred_region
          %p192 = scmp.lt.s32.totalorder %s22, 1
          %s193 = scalar_select %p192, %s22, 1
          %s194 = scalar_lea.vmem %s3, %s193
        $region32: #{tpu_custom_call.1} parent=23 // pred_fallthru
          _
      $region24: #{tpu_custom_call.1} parent=5 // pred_fallthru
        _
      %p195 = scmp.le.s32.totalorder 1, %s14
      %p196 = scmp.lt.s32.totalorder %s14, 3
      %p197 = pnand %p195, %p196
      %p198 = pneg %p197
      // Predicated region
      $region33: #{tpu_custom_call.1} parent=5 // pred_check
        _
      $region34: #{tpu_custom_call.1} parent=5 // pred_check_branch
        %200 = sbr.rel (%p197) target = $region36
      $region35: #{tpu_custom_call.1} parent=5 // pred_region
        %s201 = ssub.s32 %s14, 1
        %p202 = pneg %p47
        %p203 = pneg %p44
        %p204 = scmp.lt.s32.totalorder %s23, 0
        %s205 = scalar_select %p204, %s23, 0
        %s206 = smul.addr %s205, 8
        %s207 = scalar_lea.vmem %s1, %s206
        %p208 = pneg %p73
        %p209 = pneg %p70
        %p210 = scmp.lt.s32.totalorder %s24, 1
        %s211 = scalar_select %p210, %s24, 1
        %s212 = smul.addr %s211, 4
        %s213 = scalar_lea.vmem %s2, %s212
        %p214 = pneg %p99
        %p215 = pneg %p96
        %p216 = scmp.lt.s32.totalorder %s24, 1
        %s217 = scalar_select %p216, %s24, 1
        %s218 = scalar_lea.vmem %s3, %s217
        %p219 = pneg %p125
        %p220 = pneg %p122
        %p221 = pneg %p153
        %p222 = pneg %p150
        %s223 = sand.u32 %s140, 1
        %s224 = scalar_lea.sflag [#allocation4], %s223
        %s225 = sand.u32 %s140, 1
        %s226 = smul.addr %s225, 8
        %s227 = scalar_lea.vmem [#allocation3], %s226
        %p228 = scmp.lt.s32.totalorder %s23, 0
        %s229 = scalar_select %p228, %s23, 0
        %s230 = smul.addr %s229, 8
        %s231 = scalar_lea.vmem %s1, %s230
        %p232 = scmp.lt.s32.totalorder %s24, 1
        %s233 = scalar_select %p232, %s24, 1
        %s234 = smul.addr %s233, 4
        %s235 = scalar_lea.vmem %s2, %s234
        %p236 = scmp.lt.s32.totalorder %s24, 1
        %s237 = scalar_select %p236, %s24, 1
        %s238 = scalar_lea.vmem %s3, %s237
        %v239 = vld [vmem:[%s231] sm:$0xff]
        %v240 = vld [vmem:[%s235] sm:$0xf]
        %v241 = vld [vmem:[%s238] sm:$0x1]
        %s242 = sld [smem:[#allocation2]]
        %s243 = scvt.s32.f32 %s242
        %v244 = vstv %s243
        %v245 = vadd.f32 %v241, %v244
        %247 = vset.pattern.permute.xlu0 0
        %248 = vperm.xlu0 %247, %v239
        %v249 = vpop.permute.xlu0 %248
        %v251 = vlaneseq
        %v252 = vshrl.u32 %v251, 7
        %v253 = vsub.s32 0, %v252
        %v254 = vrot.slane %v240, %v253
        %v255 = vmul.f32 %v249, %v254
        %v257 = vlaneseq
        %v258 = vshrl.u32 %v257, 7
        %v259 = vsub.s32 0, %v258
        %v260 = vrot.slane %v245, %v259
        %v262 = vadd.f32 %v260, %v255
        %263 = vset.pattern.permute.xlu0 1
        %264 = vperm.xlu0 %263, %v239
        %v265 = vpop.permute.xlu0 %264
        %v267 = vlaneseq
        %v268 = vshrl.u32 %v267, 7
        %v269 = vsub.s32 1, %v268
        %v270 = vrot.slane %v240, %v269
        %v271 = vmul.f32 %v265, %v270
        %v272 = vadd.f32 %v262, %v271
        %273 = vset.pattern.permute.xlu0 2
        %274 = vperm.xlu0 %273, %v239
        %v275 = vpop.permute.xlu0 %274
        %v277 = vlaneseq
        %v278 = vshrl.u32 %v277, 7
        %v279 = vsub.s32 2, %v278
        %v280 = vrot.slane %v240, %v279
        %v281 = vmul.f32 %v275, %v280
        %v282 = vadd.f32 %v272, %v281
        %283 = vset.pattern.permute.xlu0 3
        %284 = vperm.xlu0 %283, %v239
        %v285 = vpop.permute.xlu0 %284
        %v287 = vlaneseq
        %v288 = vshrl.u32 %v287, 7
        %v289 = vsub.s32 3, %v288
        %v290 = vrot.slane %v240, %v289
        %v291 = vmul.f32 %v285, %v290
        %v292 = vadd.f32 %v282, %v291
        %293 = vst [vmem:[%s227] sm:$0xff] %v292
        %s294 = sand.u32 %s140, 1
        %s295 = scalar_lea.sflag [#allocation4], %s294
        %s296 = sand.u32 %s140, 1
        %s297 = smul.addr %s296, 8
        %s298 = scalar_lea.vmem [#allocation3], %s297
        // Predicated region
        $region37: #{tpu_custom_call.1} parent=35 // pred_check
          %p299 = pneg %p150
        $region38: #{tpu_custom_call.1} parent=35 // pred_check_branch
          %301 = sbr.rel (%p299) target = $region40
        $region39: #{tpu_custom_call.1} parent=35 // pred_region
          %s303 = ssub.s32 128, 128
          %304 = vsyncadd %s295, %s303
          %s305 = smul.addr %s23, 2
          %s306 = sadd.s32 %s24, %s305
          %s307 = smul.addr %s306, 128
          %s308 = scalar_lea.hbm %s4, %s307
          %s310 = sshll.u32 %s298, 4
          %s311 = int_to_ptr.vmem [resolvable:$true] %s310
          %313 = dma.vmem_to_hbm [thread:$0]  %s311, 128, %s308, %s295
        $region40: #{tpu_custom_call.1} parent=35 // pred_fallthru
          _
      $region36: #{tpu_custom_call.1} parent=5 // pred_fallthru
        _
      %p314 = scmp.le.s32.totalorder 2, %s14
      // Predicated region
      $region41: #{tpu_custom_call.1} parent=5 // pred_check
        %p315 = pneg %p314
      $region42: #{tpu_custom_call.1} parent=5 // pred_check_branch
        %317 = sbr.rel (%p315) target = $region44
      $region43: #{tpu_custom_call.1} parent=5 // pred_region
        %s318 = ssub.s32 %s14, 2
        // Predicated region
        $region45: #{tpu_custom_call.1} parent=43 // pred_check
          %p319 = pneg %p156
        $region46: #{tpu_custom_call.1} parent=43 // pred_check_branch
          %321 = sbr.rel (%p319) target = $region48
        $region47: #{tpu_custom_call.1} parent=43 // pred_region
          %s322 = sand.u32 %s141, 1
          %s323 = scalar_lea.sflag [#allocation4], %s322
          %s324 = sand.u32 %s141, 1
          %s325 = smul.addr %s324, 8
          %s326 = scalar_lea.vmem [#allocation3], %s325
          %327 = dma.done %s323, 128
        $region48: #{tpu_custom_call.1} parent=43 // pred_fallthru
          _
      $region44: #{tpu_custom_call.1} parent=5 // pred_fallthru
        _
    $region6: #{tpu_custom_call.1} parent=1 // loop_footer
      %s18 = sadd.s32 1, %s14
    $region7: #{tpu_custom_call.1} parent=1 // loop_footer_branch
      %13 = sbr.rel target = $region3
    $region8: #{tpu_custom_call.1} parent=1 // loop_exit
      _
    %328 = vsyncpa [#allocation4], 1
    %s329 = scalar_lea.sflag [#allocation4], 1
    %330 = vsyncpa %s329, 1

</llo_original>
